<compile_context>
chip_gen: v6e
topology: v6e:2x2x1
jax: 0.10.0
libtpu: 0.0.40
codegen_flags: <defaults>
</compile_context>

<pallas_src>
import functools
import math

import jax
import jax.numpy as jnp
from jax import lax
from jax.experimental import pallas as pl
from jax.experimental.pallas import tpu as pltpu


def _round_up(x, m):
    return ((x + m - 1) // m) * m


def _bahdanau_kernel(qp_ref, k_ref, ua_t_ref, va_ref, ctx_ref, w_ref,
                     m_sc, l_sc, acc_sc, *, s_valid, s_total):
    """One (batch-block, S-block) grid step of Bahdanau additive attention.

    qp_ref : (bblk, H)    f32   Wa(query)+Wa_b+Ua_b (folded in the wrapper)
    k_ref  : (bblk, Sblk, H)    keys block (mxu dtype, typically bf16)
    ua_t   : (H, H)             Ua^T (mxu dtype), grid-invariant, single-buffered
    va     : (1, H)       f32   Va row (Va_b dropped: softmax is shift invariant)
    """
    si = pl.program_id(1)
    bblk, sblk, h = k_ref.shape
    single_s_block = (s_total == sblk)

    keys = k_ref[...]                                                     # (bblk, Sblk, H)

    # One MXU pass for the Ua projection of every key row in the block (f32 accumulate).
    k_proj = jnp.dot(keys.reshape(bblk * sblk, h), ua_t_ref[...],
                     preferred_element_type=jnp.float32).reshape(bblk, sblk, h)
    t = jnp.tanh(k_proj + qp_ref[...][:, None, :])                        # (bblk, Sblk, H) f32
    # Va projection as VPU multiply + lane reduce (avoids a degenerate M=1 MXU pass).
    scores = jnp.sum(t * va_ref[...][None, :, :], axis=-1)                # (bblk, Sblk) f32

    if s_total > s_valid:  # static: padded key positions exist -> mask them out
        col = si * sblk + lax.broadcasted_iota(jnp.int32, (bblk, sblk), 1)
        scores = jnp.where(col < s_valid, scores, -jnp.inf)

    if single_s_block:
        # Fast path: the whole sequence fits in one S block -> plain stable softmax.
        m = jnp.max(scores, axis=-1, keepdims=True)
        p = jnp.exp(scores - m)
        inv_l = pl.reciprocal(jnp.sum(p, axis=-1, keepdims=True), approx=True)
        w = p * inv_l                                                     # (bblk, S)
        w_ref[...] = w.astype(w_ref.dtype)
        ctx = jnp.sum(w[:, :, None] * keys.astype(jnp.float32), axis=1)   # (bblk, H)
        ctx_ref[...] = ctx.astype(ctx_ref.dtype)
        return

    # ---------------- multi-block: flash-style online softmax over S ----------------
    @pl.when(si == 0)
    def _init():
        m_sc[...] = jnp.full_like(m_sc, -jnp.inf)
        l_sc[...] = jnp.zeros_like(l_sc)
        acc_sc[...] = jnp.zeros_like(acc_sc)

    # Stash raw (masked) scores into the resident weights output buffer; finalized later.
    start = pl.multiple_of(si * sblk, sblk)
    w_ref[:, pl.ds(start, sblk)] = scores.astype(w_ref.dtype)

    m_prev = m_sc[...]                                                    # (bblk, 1)
    m_new = jnp.maximum(m_prev, jnp.max(scores, axis=-1, keepdims=True))
    alpha = jnp.exp(m_prev - m_new)                                       # rescale factor
    p = jnp.exp(scores - m_new)                                           # masked cols -> 0
    l_sc[...] = alpha * l_sc[...] + jnp.sum(p, axis=-1, keepdims=True)
    # Context partial sum: VPU multiply + sublane reduce over the S block.
    acc_sc[...] = alpha * acc_sc[...] + jnp.sum(
        p[:, :, None] * keys.astype(jnp.float32), axis=1)
    m_sc[...] = m_new

    @pl.when(si == pl.num_programs(1) - 1)
    def _finalize():
        inv_l = pl.reciprocal(l_sc[...], approx=True)                     # EUP reciprocal
        ctx_ref[...] = (acc_sc[...] * inv_l).astype(ctx_ref.dtype)
        scores_all = w_ref[...].astype(jnp.float32)                       # (bblk, S_pad)
        w = jnp.exp(scores_all - m_sc[...]) * inv_l
        w_ref[...] = w.astype(w_ref.dtype)


def bahdanau_attention(query, keys, params, *, block_b=16, block_s=512,
                       mxu_dtype=jnp.bfloat16, vmem_budget_bytes=40 << 20):
    """query: (B, 1, H), keys: (B, S, H). Returns (context (B,1,H), weights (B,1,S))."""
    B, _, H = query.shape
    S = keys.shape[1]
    out_dtype = query.dtype

    # Hoisted query projection: a single (B,H)@(H,H) XLA matmul with both linear biases
    # folded (Wa(q)+Wa_b+Ua_b); kept in f32 into the kernel. Va_b dropped (shift invariance).
    bias = (params["Wa_b"] + params["Ua_b"]).astype(jnp.float32)
    q_proj = jnp.dot(query[:, 0, :].astype(jnp.float32),
                     params["Wa_w"].T.astype(jnp.float32),
                     preferred_element_type=jnp.float32) + bias            # (B, H) f32

    # ---- block-size / padding selection -------------------------------------------------
    # H: pad to a 128 multiple only when H > 128 (lane-dense MXU & unmasked vst); for tiny H
    # the extra HBM bytes would cost more than alignment saves.
    h_pad = H if (H <= 128 or H % 128 == 0) else _round_up(H, 128)

    if B <= 8:
        bblk = B                                       # full-dim batch block
    else:
        b8 = _round_up(B, 8)
        cap = max(8, (b8 // 2) // 8 * 8)               # >= 2 "parallel" steps (v7x megacore)
        bblk = max(8, min(max(8, (block_b // 8) * 8), cap))

    sblk = S if S <= block_s else max(128, (block_s // 128) * 128)

    mxu_bytes = jnp.dtype(mxu_dtype).itemsize
    out_bytes = jnp.dtype(out_dtype).itemsize

    def est(bb, sb):
        sp = _round_up(S, sb)
        return (2 * bb * sb * h_pad * mxu_bytes        # keys block, double buffered
                + 2 * bb * h_pad * 4                   # q_proj block
                + h_pad * h_pad * mxu_bytes            # Ua^T, single buffered
                + h_pad * 4                            # Va
                + 2 * bb * h_pad * out_bytes           # context out
                + 2 * bb * sp * out_bytes              # weights out
                + bb * h_pad * 4 + 2 * bb * 4          # acc / m / l scratch
                + 3 * bb * sb * h_pad * 4)             # f32 temporaries (k_proj, tanh, prod)

    # Shrink blocks until the live-VMEM estimate fits the budget (v7x has only 64 MiB phys).
    while est(bblk, sblk) > vmem_budget_bytes:
        new_sblk = max(128, (sblk // 2) // 128 * 128)
        if new_sblk < sblk:
            sblk = new_sblk
            continue
        new_bblk = max(8, (bblk // 2) // 8 * 8)
        if B > 8 and new_bblk < bblk:
            bblk = new_bblk
            continue
        break

    nb = -(-B // bblk)
    b_pad = nb * bblk
    s_pad = _round_up(S, sblk)
    ns = s_pad // sblk

    # ---- zero-pad operands so every block exactly divides (padding is exact: padded H
    # columns contribute nothing; padded S positions are masked; padded B rows are sliced off).
    keys_p = jnp.pad(keys.astype(mxu_dtype),
                     ((0, b_pad - B), (0, s_pad - S), (0, h_pad - H)))
    q_proj_p = jnp.pad(q_proj, ((0, b_pad - B), (0, h_pad - H)))
    ua_t_p = jnp.pad(params["Ua_w"].T.astype(mxu_dtype),
                     ((0, h_pad - H), (0, h_pad - H)))
    va_p = jnp.pad(params["Va_w"].astype(jnp.float32).reshape(1, H),
                   ((0, 0), (0, h_pad - H)))

    vmem_limit = int(min(max(est(bblk, sblk) * 5 // 4 + (1 << 20), 32 << 20), 56 << 20))

    kernel = functools.partial(_bahdanau_kernel, s_valid=S, s_total=s_pad)

    ctx2d, w2d = pl.pallas_call(
        kernel,
        out_shape=(jax.ShapeDtypeStruct((b_pad, h_pad), out_dtype),
                   jax.ShapeDtypeStruct((b_pad, s_pad), out_dtype)),
        grid=(nb, ns),
        in_specs=[
            pl.BlockSpec((bblk, h_pad), lambda b, s: (b, 0)),              # q_proj (f32)
            pl.BlockSpec((bblk, sblk, h_pad), lambda b, s: (b, s, 0)),     # keys (bf16)
            pl.BlockSpec((h_pad, h_pad), lambda b, s: (0, 0),
                         pipeline_mode=pl.Buffered(1)),                    # Ua^T, resident
            pl.BlockSpec((1, h_pad), lambda b, s: (0, 0),
                         pipeline_mode=pl.Buffered(1)),                    # Va row, resident
        ],
        out_specs=(
            pl.BlockSpec((bblk, h_pad), lambda b, s: (b, 0)),              # context (lane-dense H)
            pl.BlockSpec((bblk, s_pad), lambda b, s: (b, 0)),              # weights slab
        ),
        scratch_shapes=[
            pltpu.VMEM((bblk, 1), jnp.float32),        # running max  m
            pltpu.VMEM((bblk, 1), jnp.float32),        # running denom l
            pltpu.VMEM((bblk, h_pad), jnp.float32),    # running context accumulator
        ],
        compiler_params=pltpu.CompilerParams(
            dimension_semantics=("parallel", "arbitrary"),
            vmem_limit_bytes=vmem_limit,
        ),
    )(q_proj_p, keys_p, ua_t_p, va_p)

    # Slice away padding and restore the PyTorch (B,1,H) / (B,1,S) output shapes.
    context = ctx2d[:B, :H][:, None, :]
    weights = w2d[:B, :S][:, None, :]
    return context, weights


def _init_params(key, hidden_size):
    """Deterministic init matching nn.Linear shapes (U(-1/sqrt(fan_in), 1/sqrt(fan_in)))."""
    ks = jax.random.split(key, 6)
    bound = 1.0 / math.sqrt(hidden_size)
    u = lambda k, shape: jax.random.uniform(k, shape, jnp.float32, -bound, bound)
    return {
        "Wa_w": u(ks[0], (hidden_size, hidden_size)),
        "Wa_b": u(ks[1], (hidden_size,)),
        "Ua_w": u(ks[2], (hidden_size, hidden_size)),
        "Ua_b": u(ks[3], (hidden_size,)),
        "Va_w": u(ks[4], (1, hidden_size)),
        "Va_b": u(ks[5], (1,)),
    }


def _reference(query, keys, p):
    """Plain-JAX f32 reference mirroring the PyTorch forward (including Va_b)."""
    qp = query @ p["Wa_w"].T + p["Wa_b"]                                   # (B, 1, H)
    kp = keys @ p["Ua_w"].T + p["Ua_b"]                                    # (B, S, H)
    scores = jnp.tanh(qp + kp) @ p["Va_w"].T + p["Va_b"]                   # (B, S, 1)
    scores = scores[..., 0][:, None, :]                                    # (B, 1, S)
    weights = jax.nn.softmax(scores, axis=-1)
    context = jnp.einsum("bqs,bsh->bqh", weights, keys)
    return context, weights


if __name__ == "__main__":
    key = jax.random.PRNGKey(0)
    k_q, k_k, k_p, k_q2, k_k2, k_p2 = jax.random.split(key, 6)

    # bf16 MXU operands -> tolerance relaxed vs the f32 reference (per perf review).
    RTOL = ATOL = 2e-2

    # --- test 1: module-sized small shapes (single S block fast path) ---
    B, S, H = 2, 8, 32
    query = jax.random.normal(k_q, (B, 1, H), jnp.float32)
    keys = jax.random.normal(k_k, (B, S, H), jnp.float32)
    params = _init_params(k_p, H)

    ctx, w = bahdanau_attention(query, keys, params)
    ctx = jax.block_until_ready(ctx)
    w = jax.block_until_ready(w)
    ctx_exp, w_exp = _reference(query, keys, params)
    assert ctx.shape == (B, 1, H) and w.shape == (B, 1, S)
    assert jnp.allclose(ctx, ctx_exp, rtol=RTOL, atol=ATOL), "context mismatch (test 1)"
    assert jnp.allclose(w, w_exp, rtol=RTOL, atol=ATOL), "weights mismatch (test 1)"

    # --- test 2: exercises batch tiling, S tiling + masking, online softmax ---
    B2, S2, H2 = 9, 200, 32
    query2 = jax.random.normal(k_q2, (B2, 1, H2), jnp.float32)
    keys2 = jax.random.normal(k_k2, (B2, S2, H2), jnp.float32)
    params2 = _init_params(k_p2, H2)

    ctx2, w2 = bahdanau_attention(query2, keys2, params2, block_b=8, block_s=128)
    ctx2 = jax.block_until_ready(ctx2)
    w2 = jax.block_until_ready(w2)
    ctx2_exp, w2_exp = _reference(query2, keys2, params2)
    assert ctx2.shape == (B2, 1, H2) and w2.shape == (B2, 1, S2)
    assert jnp.allclose(ctx2, ctx2_exp, rtol=RTOL, atol=ATOL), "context mismatch (test 2)"
    assert jnp.allclose(w2, w2_exp, rtol=RTOL, atol=ATOL), "weights mismatch (test 2)"

    print("KERNEL_OK")
</pallas_src>

<mosaic_0001>
module attributes {stable_mosaic.version = 11 : i64} {
  func.func @_bahdanau_kernel(%arg0: i32, %arg1: i32, %arg2: memref<2x32xf32, #tpu.memory_space<vmem>>, %arg3: memref<2x8x32xbf16, #tpu.memory_space<vmem>>, %arg4: memref<32x32xbf16, #tpu.memory_space<vmem>>, %arg5: memref<1x32xf32, #tpu.memory_space<vmem>>, %arg6: memref<2x32xf32, #tpu.memory_space<vmem>>, %arg7: memref<2x8xf32, #tpu.memory_space<vmem>>, %arg8: memref<2x1xf32, #tpu.memory_space<vmem>>, %arg9: memref<2x1xf32, #tpu.memory_space<vmem>>, %arg10: memref<2x32xf32, #tpu.memory_space<vmem>>) attributes {dimension_semantics = [#tpu.dimension_semantics<parallel>, #tpu.dimension_semantics<arbitrary>], iteration_bounds = array<i64: 1, 1>, scalar_prefetch = 0 : i64, scratch_operands = 3 : i64, tpu.core_type = #tpu.core_type<tc>, window_params = [{transform_indices = @transform_0, window_bounds = array<i64: 2, 32>}, {transform_indices = @transform_1, window_bounds = array<i64: 2, 8, 32>}, {pipeline_mode = #tpu.pipeline_mode<synchronous>, transform_indices = @transform_2, window_bounds = array<i64: 32, 32>}, {pipeline_mode = #tpu.pipeline_mode<synchronous>, transform_indices = @transform_3, window_bounds = array<i64: 1, 32>}, {transform_indices = @transform_4, window_bounds = array<i64: 2, 32>}, {transform_indices = @transform_5, window_bounds = array<i64: 2, 8>}]} {
    %c0 = arith.constant 0 : index
    %c0_0 = arith.constant 0 : index
    %c0_1 = arith.constant 0 : index
    %0 = vector.load %arg3[%c0, %c0_0, %c0_1] : memref<2x8x32xbf16, #tpu.memory_space<vmem>>, vector<2x8x32xbf16>
    %1 = vector.shape_cast %0 : vector<2x8x32xbf16> to vector<16x32xbf16>
    %c0_2 = arith.constant 0 : index
    %c0_3 = arith.constant 0 : index
    %2 = vector.load %arg4[%c0_2, %c0_3] : memref<32x32xbf16, #tpu.memory_space<vmem>>, vector<32x32xbf16>
    %cst = arith.constant dense<0.000000e+00> : vector<16x32xf32>
    %3 = tpu.matmul %1, %2, %cst {dimension_numbers = #tpu.dot_dimension_numbers<[1], [0], [0], [1], [0, 0, 1, 1], [], []>} : vector<16x32xbf16>, vector<32x32xbf16>, vector<16x32xf32> -> vector<16x32xf32>
    %4 = vector.shape_cast %3 : vector<16x32xf32> to vector<2x8x32xf32>
    %c0_4 = arith.constant 0 : index
    %c0_5 = arith.constant 0 : index
    %5 = vector.load %arg2[%c0_4, %c0_5] : memref<2x32xf32, #tpu.memory_space<vmem>>, vector<2x32xf32>
    %6 = vector.shape_cast %5 : vector<2x32xf32> to vector<2x1x32xf32>
    %7 = vector.broadcast %6 : vector<2x1x32xf32> to vector<2x8x32xf32>
    %8 = arith.addf %4, %7 : vector<2x8x32xf32>
    %9 = math.tanh %8 : vector<2x8x32xf32>
    %c0_6 = arith.constant 0 : index
    %c0_7 = arith.constant 0 : index
    %10 = vector.load %arg5[%c0_6, %c0_7] : memref<1x32xf32, #tpu.memory_space<vmem>>, vector<1x32xf32>
    %11 = vector.shape_cast %10 : vector<1x32xf32> to vector<1x1x32xf32>
    %12 = vector.broadcast %11 : vector<1x1x32xf32> to vector<2x8x32xf32>
    %13 = arith.mulf %9, %12 : vector<2x8x32xf32>
    %cst_8 = arith.constant dense<0.000000e+00> : vector<2x8xf32>
    %14 = vector.multi_reduction <add>, %13, %cst_8 [2] : vector<2x8x32xf32> to vector<2x8xf32>
    %cst_9 = arith.constant dense<0xFF800000> : vector<2xf32>
    %15 = vector.multi_reduction <maximumf>, %14, %cst_9 [1] : vector<2x8xf32> to vector<2xf32>
    %16 = vector.shape_cast %15 : vector<2xf32> to vector<2x1xf32>
    %17 = vector.broadcast %16 : vector<2x1xf32> to vector<2x8xf32>
    %18 = arith.subf %14, %17 : vector<2x8xf32>
    %19 = math.exp %18 : vector<2x8xf32>
    %cst_10 = arith.constant dense<0.000000e+00> : vector<2xf32>
    %20 = vector.multi_reduction <add>, %19, %cst_10 [1] : vector<2x8xf32> to vector<2xf32>
    %21 = vector.shape_cast %20 : vector<2xf32> to vector<2x1xf32>
    %22 = tpu.reciprocal %21 {approx = true} : vector<2x1xf32> -> vector<2x1xf32>
    %23 = vector.broadcast %22 : vector<2x1xf32> to vector<2x8xf32>
    %24 = arith.mulf %19, %23 : vector<2x8xf32>
    %c0_11 = arith.constant 0 : index
    %c0_12 = arith.constant 0 : index
    %25 = vector.load %arg7[%c0_11, %c0_12] : memref<2x8xf32, #tpu.memory_space<vmem>>, vector<2x8xf32>
    tpu.vector_store %arg7[%c0_11, %c0_12], %24 {strides = array<i32>} : memref<2x8xf32, #tpu.memory_space<vmem>>, vector<2x8xf32>,
    %26 = vector.shape_cast %24 : vector<2x8xf32> to vector<2x8x1xf32>
    %27 = arith.extf %0 : vector<2x8x32xbf16> to vector<2x8x32xf32>
    %28 = vector.broadcast %26 : vector<2x8x1xf32> to vector<2x8x32xf32>
    %29 = arith.mulf %28, %27 : vector<2x8x32xf32>
    %cst_13 = arith.constant dense<0.000000e+00> : vector<2x32xf32>
    %30 = vector.multi_reduction <add>, %29, %cst_13 [1] : vector<2x8x32xf32> to vector<2x32xf32>
    %c0_14 = arith.constant 0 : index
    %c0_15 = arith.constant 0 : index
    %31 = vector.load %arg6[%c0_14, %c0_15] : memref<2x32xf32, #tpu.memory_space<vmem>>, vector<2x32xf32>
    tpu.vector_store %arg6[%c0_14, %c0_15], %30 {strides = array<i32>} : memref<2x32xf32, #tpu.memory_space<vmem>>, vector<2x32xf32>,
    return
  }
  func.func @transform_0(%arg0: i32, %arg1: i32) -> (i32, i32) {
    %c0_i32 = arith.constant 0 : i32
    %c0_i32_0 = arith.constant 0 : i32
    return %arg0, %c0_i32 : i32, i32
  }
  func.func @transform_1(%arg0: i32, %arg1: i32) -> (i32, i32, i32) {
    %c0_i32 = arith.constant 0 : i32
    %c0_i32_0 = arith.constant 0 : i32
    return %arg0, %arg1, %c0_i32 : i32, i32, i32
  }
  func.func @transform_2(%arg0: i32, %arg1: i32) -> (i32, i32) {
    %c0_i32 = arith.constant 0 : i32
    %c0_i32_0 = arith.constant 0 : i32
    %c0_i32_1 = arith.constant 0 : i32
    return %c0_i32, %c0_i32_0 : i32, i32
  }
  func.func @transform_3(%arg0: i32, %arg1: i32) -> (i32, i32) {
    %c0_i32 = arith.constant 0 : i32
    %c0_i32_0 = arith.constant 0 : i32
    %c0_i32_1 = arith.constant 0 : i32
    return %c0_i32, %c0_i32_0 : i32, i32
  }
  func.func @transform_4(%arg0: i32, %arg1: i32) -> (i32, i32) {
    %c0_i32 = arith.constant 0 : i32
    %c0_i32_0 = arith.constant 0 : i32
    return %arg0, %c0_i32 : i32, i32
  }
  func.func @transform_5(%arg0: i32, %arg1: i32) -> (i32, i32) {
    %c0_i32 = arith.constant 0 : i32
    %c0_i32_0 = arith.constant 0 : i32
    return %arg0, %c0_i32 : i32, i32
  }
}

</mosaic_0001>

<llo_original>
// kernel: tpu_custom_call.1
$region0: #{tpu_custom_call.1}
  #allocation0 [shape = 'u32[]', space=smem, size = 0x4, offset = 0x4, fixed_abs, tag = 'smem constant byte address 0x4 - core index']
  #allocation1 [shape = 'u32[144,128]{1,0:T(1,128)}', space=vmem, size = 0x12000, scoped, tag = 'internal scratch']
  #allocation2 [shape = 'f32[2,1]{1,0:T(2,128)}', space=vmem, size = 0x400, scoped, tag = 'scratch operand']
  #allocation3 [shape = 'f32[2,1]{1,0:T(2,128)}', space=vmem, size = 0x400, scoped, tag = 'scratch operand']
  #allocation4 [shape = 'f32[2,32]{1,0:T(2,128)}', space=vmem, size = 0x400, scoped, tag = 'scratch operand']
  %s0 = inlined_call_operand.hbm [shape: f32[2,32], index: 0, kind: input, shape index: {}]
  %s1 = inlined_call_operand.hbm [shape: bf16[2,8,32], index: 1, kind: input, shape index: {}]
  %s2 = inlined_call_operand.hbm [shape: bf16[32,32], index: 2, kind: input, shape index: {}]
  %s3 = inlined_call_operand.vmem [shape: f32[1,32], index: 3, kind: input, shape index: {}]
  %s4 = inlined_call_operand.hbm [shape: f32[2,32], index: 4, kind: output, shape index: {0}]
  %s5 = inlined_call_operand.hbm [shape: f32[2,8], index: 5, kind: output, shape index: {1}]
  %6 = xla_tuple %s4, %s5
  %s7 = sld [smem:[#allocation0]]
  $region46: #{tpu_custom_call.1} parent=0
    _
  %s9 = ssub.s32 1, %s7
  %s10 = scalar_select 0, %s9, %s7
  $region1: #{tpu_custom_call.1} parent=0
    #allocation5 [shape = 'u8[1024]{0}', space=vmem, size = 0x400, scoped, tag = 'input window, operand 0, single buffered']
    #allocation6 [shape = 's32[1]{0}', space=sflag, size = 0x4, scoped, tag = 'scoped memory for tpu_custom_call.1']
    #allocation7 [shape = 's32[1]{0}', space=sflag, size = 0x4, scoped, tag = 'scoped memory for tpu_custom_call.1']
    #allocation8 [shape = 'u8[4096]{0}', space=vmem, size = 0x1000, scoped, tag = 'input window, operand 1, single buffered']
    #allocation9 [shape = 's32[1]{0}', space=sflag, size = 0x4, scoped, tag = 'scoped memory for tpu_custom_call.1']
    #allocation10 [shape = 'u8[8192]{0}', space=vmem, size = 0x2000, scoped, tag = 'input window, operand 2, single buffered']
    #allocation11 [shape = 'u8[1024]{0}', space=vmem, size = 0x400, scoped, tag = 'output window, operand 0, single buffered']
    #allocation12 [shape = 'u8[1024]{0}', space=vmem, size = 0x400, scoped, tag = 'output window, operand 1, single buffered']
    #allocation13 [shape = 's32[1]{0}', space=sflag, size = 0x4, scoped, tag = 'scoped memory for tpu_custom_call.1']
    %11 = vsyncpa [#allocation6], 0
    %12 = vsyncpa [#allocation9], 0
    %13 = vsyncpa [#allocation7], 0
    %14 = vsyncpa [#allocation13], 0
    // Predicated region
    $region2: #{tpu_custom_call.1} parent=1 // pred_check
      _
    $region3: #{tpu_custom_call.1} parent=1 // pred_check_branch
      %16 = sbr.rel (0) target = $region5
    $region4: #{tpu_custom_call.1} parent=1 // pred_region
      %s18 = ssub.s32 32, 32
      %19 = vsyncadd [#allocation6], %s18
      %s21 = sshll.u32 [#allocation5], 4
      %s22 = int_to_ptr.vmem [resolvable:$true] %s21
      %24 = dma.hbm_to_vmem [thread:$0]  %s0, 32, %s22, [#allocation6]
    $region5: #{tpu_custom_call.1} parent=1 // pred_fallthru
      _
    // Predicated region
    $region6: #{tpu_custom_call.1} parent=1 // pred_check
      _
    $region7: #{tpu_custom_call.1} parent=1 // pred_check_branch
      %26 = sbr.rel (0) target = $region9
    $region8: #{tpu_custom_call.1} parent=1 // pred_region
      %s28 = ssub.s32 128, 128
      %29 = vsyncadd [#allocation9], %s28
      %s30 = sshll.u32 [#allocation8], 4
      %s31 = int_to_ptr.vmem [resolvable:$true] %s30
      %36 = dma.hbm_to_vmem [thread:$0]  %s1, 128, %s31, [#allocation9], 64, 64, 4
    $region9: #{tpu_custom_call.1} parent=1 // pred_fallthru
      _
    // Predicated region
    $region10: #{tpu_custom_call.1} parent=1 // pred_check
      _
    $region11: #{tpu_custom_call.1} parent=1 // pred_check_branch
      %38 = sbr.rel (0) target = $region13
    $region12: #{tpu_custom_call.1} parent=1 // pred_region
      %s40 = ssub.s32 256, 256
      %41 = vsyncadd [#allocation9], %s40
      %s42 = sshll.u32 [#allocation10], 4
      %s43 = int_to_ptr.vmem [resolvable:$true] %s42
      %48 = dma.hbm_to_vmem [thread:$0]  %s2, 256, %s43, [#allocation9], 64, 64, 4
    $region13: #{tpu_custom_call.1} parent=1 // pred_fallthru
      _
    // Predicated region
    $region14: #{tpu_custom_call.1} parent=1 // pred_check
      _
    $region15: #{tpu_custom_call.1} parent=1 // pred_check_branch
      %50 = sbr.rel (0) target = $region17
    $region16: #{tpu_custom_call.1} parent=1 // pred_region
      _
    $region17: #{tpu_custom_call.1} parent=1 // pred_fallthru
      _
    // Predicated region
    $region18: #{tpu_custom_call.1} parent=1 // pred_check
      _
    $region19: #{tpu_custom_call.1} parent=1 // pred_check_branch
      %52 = sbr.rel (0) target = $region21
    $region20: #{tpu_custom_call.1} parent=1 // pred_region
      %53 = dma.done [#allocation6], 32
    $region21: #{tpu_custom_call.1} parent=1 // pred_fallthru
      _
    // Predicated region
    $region22: #{tpu_custom_call.1} parent=1 // pred_check
      _
    $region23: #{tpu_custom_call.1} parent=1 // pred_check_branch
      %55 = sbr.rel (0) target = $region25
    $region24: #{tpu_custom_call.1} parent=1 // pred_region
      %56 = dma.done [#allocation9], 128
    $region25: #{tpu_custom_call.1} parent=1 // pred_fallthru
      _
    // Predicated region
    $region26: #{tpu_custom_call.1} parent=1 // pred_check
      _
    $region27: #{tpu_custom_call.1} parent=1 // pred_check_branch
      %58 = sbr.rel (0) target = $region29
    $region28: #{tpu_custom_call.1} parent=1 // pred_region
      %59 = dma.done [#allocation9], 256
    $region29: #{tpu_custom_call.1} parent=1 // pred_fallthru
      _
    %v61 = vld [vmem:[#allocation8] sm:$0xf]
    %v62 = vld [vmem:[#allocation8 + $0x4] sm:$0xf]
    %v63 = vld [vmem:[#allocation10] sm:$0xf]
    %v64 = vld [vmem:[#allocation10 + $0x4] sm:$0xf]
    %v65 = vld [vmem:[#allocation10 + $0x8] sm:$0xf]
    %v66 = vld [vmem:[#allocation10 + $0xc] sm:$0xf]
    %v69 = vunpack.c.l.b16 %v61
    %v70 = vunpack.c.l.b16 %v62
    %v71 = vpack.c.b16 %v70, %v69
    %v76 = vunpack.c.l.b16 %v63
    %v77 = vunpack.c.l.b16 %v64
    %v78 = vunpack.c.l.b16 %v65
    %v79 = vunpack.c.l.b16 %v66
    %v80 = vpack.c.b16 %v77, %v76
    %v81 = vpack.c.b16 %v79, %v78
    %vm84 = vcmask 261120
    %v86 = vsel %vm84, %v71, 0
    %88 = vmatprep.subr.bf16.mxu0 0
    %89 = vmatpush1.bf16.msra.mxu0 0
    %90 = vmatprep.subr.bf16.mxu0 0
    %91 = vmatpush1.bf16.msra.mxu0 0
    %92 = vmatprep.subr.bf16.mxu0 0
    %93 = vmatpush1.bf16.msra.mxu0 0
    %94 = vmatprep.subr.bf16.mxu0 0
    %95 = vmatpush1.bf16.msra.mxu0 0
    %96 = vmatprep.subr.bf16.mxu0 0
    %97 = vmatpush1.bf16.msra.mxu0 0
    %98 = vmatprep.subr.bf16.mxu0 0
    %99 = vmatpush1.bf16.msra.mxu0 0
    %100 = vmatprep.subr.bf16.mxu0 0
    %101 = vmatpush1.bf16.msra.mxu0 %v81
    %102 = vmatprep.subr.bf16.mxu0 0
    %103 = vmatpush1.bf16.msra.mxu0 %v80
    %104 = vmatprep.subr.bf16.mxu0 0
    %105 = vmatpush2.bf16.msra.mxu0 0
    %106 = vmatprep.subr.bf16.mxu0 0
    %107 = vmatpush2.bf16.msra.mxu0 0
    %108 = vmatprep.subr.bf16.mxu0 0
    %109 = vmatpush2.bf16.msra.mxu0 0
    %110 = vmatprep.subr.bf16.mxu0 0
    %111 = vmatpush2.bf16.msra.mxu0 0
    %112 = vmatprep.subr.bf16.mxu0 0
    %113 = vmatpush2.bf16.msra.mxu0 0
    %114 = vmatprep.subr.bf16.mxu0 0
    %115 = vmatpush2.bf16.msra.mxu0 0
    %116 = vmatprep.subr.bf16.mxu0 0
    %117 = vmatpush2.bf16.msra.mxu0 0
    %118 = vmatprep.subr.bf16.mxu0 0
    %119 = vmatpush2.bf16.msra.mxu0 0
    %120 = vmatprep.mubr.bf16.mxu0 0
    %121 = vmatmul.mubr.bf16.gmra.mxu0 %v86
    %v122 = vpop.f32.mrf.mxu0
    %v123 = vadd.f32 0.0, %v122
    %v124 = vpop.f32.mrf.mxu0
    %v125 = vpop.f32.mrf.mxu0
    %v126 = vadd.f32 0.0, %v125
    %v127 = vpop.f32.mrf.mxu0
    %128 = vdwg.mxu0
    %v129 = vld [vmem:[#allocation5] sm:$0x3]
    %v132 = vunpack.c.l.s4 1966171168
    %v133 = vunpack.c.0.s8 %v132
    %v134 = vlaneseq
    %v135 = vshrl.u32 %v134, 7
    %v136 = vsub.s32 %v133, %v135
    %v137 = vrot.slane %v129, %v136
    %v138 = vcombine.high %v137, %v137
    %v140 = vunpack.c.l.s4 1966171168
    %v141 = vunpack.c.0.s8 %v140
    %v142 = vlaneseq
    %v143 = vshrl.u32 %v142, 7
    %v144 = vsub.s32 %v141, %v143
    %v145 = vrot.slane %v137, %v144
    %v147 = vunpack.c.l.s4 1966171168
    %v148 = vunpack.c.0.s8 %v147
    %v149 = vlaneseq
    %v150 = vshrl.u32 %v149, 7
    %v151 = vsub.s32 %v148, %v150
    %v152 = vrot.slane %v138, %v151
    %v153 = vlaneseq
    %v154 = vshrl.u32 %v153, 7
    %v155 = vsub.s32 0, %v154
    %v156 = vrot.slane %v145, %v155
    %v157 = vlaneseq
    %v158 = vshrl.u32 %v157, 7
    %v159 = vsub.s32 0, %v158
    %v160 = vrot.slane %v152, %v159
    %v163 = vadd.f32 %v123, %v156
    %v164 = vadd.f32 %v126, %v160
    %v165 = vtanh.pop %v163
    %v166 = vtanh.pop %v164
    %v167 = vld [vmem:[%s3] sm:$0x1]
    %v169 = vlaneseq
    %v170 = vshrl.u32 %v169, 7
    %v171 = vsub.s32 0, %v170
    %v172 = vrot.slane %v167, %v171
    %v174 = vmul.f32 %v165, %v172
    %v175 = vmul.f32 %v166, %v172
    %v176 = vsel %vm84, %v174, 0.0
    %177 = vadd.xlane.f32.xlu0 %v176
    %v178 = vpop.xlane.xlu0 %177
    %v179 = vsel %vm84, %v175, 0.0
    %180 = vadd.xlane.f32.xlu0 %v179
    %v181 = vpop.xlane.xlu0 %180
    %v184 = vlaneseq
    %v185 = vand.u32 %v184, 127
    %v186 = vlaneseq
    %v187 = vshrl.u32 %v186, 7
    %v188 = vsub.s32 %v185, %v187
    %v189 = vrot.slane %v178, %v188
    %v190 = vlaneseq
    %v191 = vshrl.u32 %v190, 7
    %v192 = vsub.s32 %v185, %v191
    %v193 = vrot.slane %v181, %v192
    %vm194 = vcmask 1041409
    %v195 = vsel %vm194, %v193, %v189
    %vm197 = vcmask 58368
    %v198 = vsel %vm197, %v195, -inf
    %199 = vmax.xlane.f32.xlu0 %v198
    %v200 = vpop.xlane.xlu0 %199
    %v202 = vlaneseq
    %v203 = vshrl.u32 %v202, 7
    %v204 = vsub.s32 0, %v203
    %v205 = vrot.slane %v200, %v204
    %v206 = vlaneseq
    %v207 = vshrl.u32 %v206, 7
    %v208 = vsub.s32 1, %v207
    %v209 = vrot.slane %v200, %v208
    %v212 = vsub.f32 %v178, %v205
    %v213 = vsub.f32 %v181, %v209
    %v214 = vmul.f32 %v212, 1.442695
    %v215 = vpow.pop %v214
    %v216 = vmul.f32 %v213, 1.442695
    %v217 = vpow.pop %v216
    %220 = vset.pattern.permute.xlu0 0
    %221 = vperm.xlu0 %220, %v215
    %v222 = vpop.permute.xlu0 %221
    %223 = vset.pattern.permute.xlu0 0
    %224 = vperm.xlu0 %223, %v217
    %v225 = vpop.permute.xlu0 %224
    %v226 = vlaneseq
    %v227 = vshrl.u32 %v226, 7
    %v228 = vsub.s32 %v185, %v227
    %v229 = vrot.slane %v222, %v228
    %v230 = vlaneseq
    %v231 = vshrl.u32 %v230, 7
    %v232 = vsub.s32 %v185, %v231
    %v233 = vrot.slane %v225, %v232
    %v234 = vsel %vm194, %v233, %v229
    %v236 = vsel %vm197, %v234, 0.0
    %237 = vadd.xlane.f32.xlu0 %v236
    %v238 = vpop.xlane.xlu0 %237
    %v239 = vrcp.pop %v238
    %v241 = vlaneseq
    %v242 = vshrl.u32 %v241, 7
    %v243 = vsub.s32 0, %v242
    %v244 = vrot.slane %v239, %v243
    %v245 = vlaneseq
    %v246 = vshrl.u32 %v245, 7
    %v247 = vsub.s32 1, %v246
    %v248 = vrot.slane %v239, %v247
    %v251 = vmul.f32 %v215, %v244
    %v252 = vmul.f32 %v217, %v248
    %255 = vset.pattern.permute.xlu0 0
    %256 = vperm.xlu0 %255, %v251
    %v257 = vpop.permute.xlu0 %256
    %258 = vset.pattern.permute.xlu0 0
    %259 = vperm.xlu0 %258, %v252
    %v260 = vpop.permute.xlu0 %259
    %v261 = vlaneseq
    %v262 = vshrl.u32 %v261, 7
    %v263 = vsub.s32 %v185, %v262
    %v264 = vrot.slane %v257, %v263
    %v265 = vlaneseq
    %v266 = vshrl.u32 %v265, 7
    %v267 = vsub.s32 %v185, %v266
    %v268 = vrot.slane %v260, %v267
    %v269 = vsel %vm194, %v268, %v264
    %271 = vst.msk [vmem:[#allocation12] sm:$0x3] %vm197, %v269
    %v272 = vunpack.c.l.bf16 %v61
    %v273 = vunpack.c.l.bf16 %v62
    %v276 = vmul.f32 %v257, %v272
    %v277 = vmul.f32 %v260, %v273
    %v278 = vsel %vm84, %v276, 0.0
    %v279 = vrot.slane %v278, 4
    %v280 = vadd.f32 %v278, %v279
    %v281 = vrot.slane %v280, 2
    %v282 = vadd.f32 %v280, %v281
    %v283 = vrot.slane %v282, 1
    %v284 = vadd.f32 %v282, %v283
    %v285 = vsel %vm84, %v277, 0.0
    %v286 = vrot.slane %v285, 4
    %v287 = vadd.f32 %v285, %v286
    %v288 = vrot.slane %v287, 2
    %v289 = vadd.f32 %v287, %v288
    %v290 = vrot.slane %v289, 1
    %v291 = vadd.f32 %v289, %v290
    %v294 = vsel %vm194, %v291, %v284
    %vm296 = vcmask 254976
    %297 = vst.msk [vmem:[#allocation11] sm:$0x3] %vm296, %v294
    // Predicated region
    $region30: #{tpu_custom_call.1} parent=1 // pred_check
      _
    $region31: #{tpu_custom_call.1} parent=1 // pred_check_branch
      %299 = sbr.rel (0) target = $region33
    $region32: #{tpu_custom_call.1} parent=1 // pred_region
      %s301 = ssub.s32 32, 32
      %302 = vsyncadd [#allocation7], %s301
      %s304 = sshll.u32 [#allocation11], 4
      %s305 = int_to_ptr.vmem [resolvable:$true] %s304
      %307 = dma.vmem_to_hbm [thread:$0]  %s305, 32, %s4, [#allocation7]
    $region33: #{tpu_custom_call.1} parent=1 // pred_fallthru
      _
    // Predicated region
    $region34: #{tpu_custom_call.1} parent=1 // pred_check
      _
    $region35: #{tpu_custom_call.1} parent=1 // pred_check_branch
      %309 = sbr.rel (0) target = $region37
    $region36: #{tpu_custom_call.1} parent=1 // pred_region
      %s311 = ssub.s32 32, 32
      %312 = vsyncadd [#allocation13], %s311
      %s314 = sshll.u32 [#allocation12], 4
      %s315 = int_to_ptr.vmem [resolvable:$true] %s314
      %317 = dma.vmem_to_hbm [thread:$0]  %s315, 32, %s5, [#allocation13]
    $region37: #{tpu_custom_call.1} parent=1 // pred_fallthru
      _
    // Predicated region
    $region38: #{tpu_custom_call.1} parent=1 // pred_check
      _
    $region39: #{tpu_custom_call.1} parent=1 // pred_check_branch
      %319 = sbr.rel (0) target = $region41
    $region40: #{tpu_custom_call.1} parent=1 // pred_region
      %320 = dma.done [#allocation7], 32
    $region41: #{tpu_custom_call.1} parent=1 // pred_fallthru
      _
    // Predicated region
    $region42: #{tpu_custom_call.1} parent=1 // pred_check
      _
    $region43: #{tpu_custom_call.1} parent=1 // pred_check_branch
      %322 = sbr.rel (0) target = $region45
    $region44: #{tpu_custom_call.1} parent=1 // pred_region
      %323 = dma.done [#allocation13], 32
    $region45: #{tpu_custom_call.1} parent=1 // pred_fallthru
      _
    %324 = vsyncpa [#allocation6], 1
    %325 = vsyncpa [#allocation9], 1
    %326 = vsyncpa [#allocation7], 1
    %327 = vsyncpa [#allocation13], 1

</llo_original>
